<compile_context>
chip_gen: v5e
topology: v5e:2x2
jax: 0.10.0
libtpu: 0.0.40
codegen_flags: <defaults>
</compile_context>

<pallas_src>
import jax
import jax.numpy as jnp
from jax.experimental import pallas as pl
from jax.experimental.pallas import tpu as pltpu


def _softmax_stable_kernel(x_ref, o_ref):
    x = x_ref[...]
    # Per-column max: identical result to the global torch.max(x) shift
    # (the constant cancels in the ratio), but stays a sublane-only reduce
    # and keeps columns independent for D-tiling.
    c = jnp.max(x, axis=0, keepdims=True)
    e = jnp.exp(x - c)
    s = jnp.sum(e, axis=0, keepdims=True)            # reduce over dim 0
    o_ref[...] = e * pl.reciprocal(s, approx=False)  # divide -> recip + VPU mul


def _softmax_stable_2d(x, *, max_block_bytes=4 * 1024 * 1024):
    N, D = x.shape
    itemsize = jnp.dtype(x.dtype).itemsize

    if D % 128 == 0:
        # Largest multiple-of-128 lane tile that divides D and keeps the
        # (N, tD) block within the per-block byte cap (v7x-safe with
        # double-buffered input + output).
        cap_lanes = max(128, (max_block_bytes // max(N * itemsize, 1)) // 128 * 128)
        td = min(D, cap_lanes)
        while D % td != 0:
            td -= 128
    else:
        # Small / irregular last dim: one whole-array block (full-extent block
        # dims are always legal regardless of the (8,128) tiling rule).
        # TODO(synk): arrays too large for VMEM with D not a multiple of 128
        # would need a padded or two-pass path.
        td = D

    grid = (D // td,)
    spec = pl.BlockSpec((N, td), lambda j: (0, j))

    return pl.pallas_call(
        _softmax_stable_kernel,
        out_shape=jax.ShapeDtypeStruct((N, D), x.dtype),
        grid=grid,
        in_specs=[spec],
        out_specs=spec,
        compiler_params=pltpu.CompilerParams(
            dimension_semantics=("parallel",),
            vmem_limit_bytes=64 * 1024 * 1024,
        ),
    )(x)


def softmax_stable(x):
    """Matches the PyTorch forward: exp(x - max(x)) / sum(exp(x - max(x)), dim=0)."""
    if x.ndim == 2:
        return _softmax_stable_2d(x)
    # General rank: flatten trailing dims (dim 0 semantics preserved).
    orig_shape = x.shape
    out = _softmax_stable_2d(x.reshape(orig_shape[0], -1))
    return out.reshape(orig_shape)


def _reference(x):
    # Pure-JAX reference of the exact PyTorch math (global max shift).
    c = jnp.max(x)
    e = jnp.exp(x - c)
    return e / jnp.sum(e, axis=0)


if __name__ == "__main__":
    key = jax.random.PRNGKey(0)

    # Small shape consistent with the module's forward (seq=8, hidden=32):
    # exercises the whole-array-block fallback path.
    x_small = jax.random.normal(key, (8, 32), dtype=jnp.float32)
    out_small = jax.block_until_ready(softmax_stable(x_small))
    assert out_small.shape == x_small.shape and out_small.dtype == x_small.dtype
    assert jnp.allclose(out_small, _reference(x_small), atol=1e-6, rtol=1e-5)

    # Slightly larger shape to exercise the lane-dense D-tiled grid path.
    key2 = jax.random.PRNGKey(0)
    x_big = jax.random.normal(key2, (128, 512), dtype=jnp.float32)
    out_big = jax.block_until_ready(softmax_stable(x_big))
    assert out_big.shape == x_big.shape and out_big.dtype == x_big.dtype
    assert jnp.allclose(out_big, _reference(x_big), atol=1e-6, rtol=1e-5)

    print("KERNEL_OK")
</pallas_src>

<mosaic_0001>
module attributes {stable_mosaic.version = 11 : i64} {
  func.func @_softmax_stable_kernel(%arg0: i32, %arg1: memref<8x32xf32, #tpu.memory_space<vmem>>, %arg2: memref<8x32xf32, #tpu.memory_space<vmem>>) attributes {dimension_semantics = [#tpu.dimension_semantics<parallel>], iteration_bounds = array<i64: 1>, scalar_prefetch = 0 : i64, scratch_operands = 0 : i64, tpu.core_type = #tpu.core_type<tc>, window_params = [{transform_indices = @transform_0, window_bounds = array<i64: 8, 32>}, {transform_indices = @transform_1, window_bounds = array<i64: 8, 32>}]} {
    %c0 = arith.constant 0 : index
    %c0_0 = arith.constant 0 : index
    %0 = vector.load %arg1[%c0, %c0_0] : memref<8x32xf32, #tpu.memory_space<vmem>>, vector<8x32xf32>
    %cst = arith.constant dense<0xFF800000> : vector<32xf32>
    %1 = vector.multi_reduction <maximumf>, %0, %cst [0] : vector<8x32xf32> to vector<32xf32>
    %2 = vector.shape_cast %1 : vector<32xf32> to vector<1x32xf32>
    %3 = vector.broadcast %2 : vector<1x32xf32> to vector<8x32xf32>
    %4 = arith.subf %0, %3 : vector<8x32xf32>
    %5 = math.exp %4 : vector<8x32xf32>
    %cst_1 = arith.constant dense<0.000000e+00> : vector<32xf32>
    %6 = vector.multi_reduction <add>, %5, %cst_1 [0] : vector<8x32xf32> to vector<32xf32>
    %7 = vector.shape_cast %6 : vector<32xf32> to vector<1x32xf32>
    %8 = tpu.reciprocal %7 : vector<1x32xf32> -> vector<1x32xf32>
    %9 = vector.broadcast %8 : vector<1x32xf32> to vector<8x32xf32>
    %10 = arith.mulf %5, %9 : vector<8x32xf32>
    %c0_2 = arith.constant 0 : index
    %c0_3 = arith.constant 0 : index
    %11 = vector.load %arg2[%c0_2, %c0_3] : memref<8x32xf32, #tpu.memory_space<vmem>>, vector<8x32xf32>
    tpu.vector_store %arg2[%c0_2, %c0_3], %10 {strides = array<i32>} : memref<8x32xf32, #tpu.memory_space<vmem>>, vector<8x32xf32>,
    return
  }
  func.func @transform_0(%arg0: i32) -> (i32, i32) {
    %c0_i32 = arith.constant 0 : i32
    %c0_i32_0 = arith.constant 0 : i32
    return %c0_i32, %arg0 : i32, i32
  }
  func.func @transform_1(%arg0: i32) -> (i32, i32) {
    %c0_i32 = arith.constant 0 : i32
    %c0_i32_0 = arith.constant 0 : i32
    return %c0_i32, %arg0 : i32, i32
  }
}

</mosaic_0001>

<llo_original>
// kernel: tpu_custom_call.1
$region0: #{tpu_custom_call.1}
  #allocation0 [shape = 'u32[]', space=smem, size = 0x4, offset = 0x4, fixed_abs, tag = 'smem constant byte address 0x4 - core index']
  #allocation1 [shape = 'u32[72,128]{1,0:T(1,128)}', space=vmem, size = 0x9000, scoped, tag = 'internal scratch']
  %s0 = inlined_call_operand.hbm [shape: f32[8,32], index: 0, kind: input, shape index: {}]
  %s1 = inlined_call_operand.hbm [shape: f32[8,32], index: 1, kind: output, shape index: {}]
  %s2 = sld [smem:[#allocation0]]
  $region18: #{tpu_custom_call.1} parent=0
    _
  %s4 = ssub.s32 1, %s2
  %s5 = scalar_select 0, %s4, %s2
  $region1: #{tpu_custom_call.1} parent=0
    #allocation2 [shape = 'u8[4096]{0}', space=vmem, size = 0x1000, scoped, tag = 'input window, operand 0, single buffered']
    #allocation3 [shape = 's32[1]{0}', space=sflag, size = 0x4, scoped, tag = 'scoped memory for tpu_custom_call.1']
    #allocation4 [shape = 's32[1]{0}', space=sflag, size = 0x4, scoped, tag = 'scoped memory for tpu_custom_call.1']
    #allocation5 [shape = 'u8[4096]{0}', space=vmem, size = 0x1000, scoped, tag = 'output window, operand 0, single buffered']
    %6 = vsyncpa [#allocation3], 0
    %7 = vsyncpa [#allocation4], 0
    // Predicated region
    $region2: #{tpu_custom_call.1} parent=1 // pred_check
      _
    $region3: #{tpu_custom_call.1} parent=1 // pred_check_branch
      %9 = sbr.rel (0) target = $region5
    $region4: #{tpu_custom_call.1} parent=1 // pred_region
      %11 = vsyncadd [#allocation3], 0
      %s13 = sshll.u32 %s0, 4
      %s14 = int_to_ptr.hbm [resolvable:$true] %s13
      %s15 = sshll.u32 [#allocation2], 4
      %s16 = int_to_ptr.vmem [resolvable:$true] %s15
      %18 = dma.hbm_to_vmem [thread:$0]  %s14, 128, %s16, [#allocation3]
    $region5: #{tpu_custom_call.1} parent=1 // pred_fallthru
      _
    // Predicated region
    $region6: #{tpu_custom_call.1} parent=1 // pred_check
      _
    $region7: #{tpu_custom_call.1} parent=1 // pred_check_branch
      %20 = sbr.rel (0) target = $region9
    $region8: #{tpu_custom_call.1} parent=1 // pred_region
      %22 = dma.done [#allocation3], 128
    $region9: #{tpu_custom_call.1} parent=1 // pred_fallthru
      _
    %v23 = vld [vmem:[#allocation2] sm:$0xff]
    %vm24 = vcmask 261120
    %v25 = vsel %vm24, %v23, -inf
    %v26 = vrot.slane %v25, 4
    %v27 = vmax.f32 %v25, %v26
    %v28 = vrot.slane %v27, 2
    %v29 = vmax.f32 %v27, %v28
    %v30 = vrot.slane %v29, 1
    %v31 = vmax.f32 %v29, %v30
    %v32 = vsub.f32 %v23, %v31
    %v33 = vmul.f32 %v32, 1.442695
    %v34 = vpow.pop %v33
    %v35 = vsel %vm24, %v34, 0.0
    %v36 = vrot.slane %v35, 4
    %v37 = vadd.f32 %v35, %v36
    %v38 = vrot.slane %v37, 2
    %v39 = vadd.f32 %v37, %v38
    %v40 = vrot.slane %v39, 1
    %v41 = vadd.f32 %v39, %v40
    %v42 = vrcp.pop %v41
    %v43 = vmul.f32 %v41, %v42
    %v44 = vsub.f32 1.0, %v43
    %v45 = vmul.f32 %v42, %v44
    %v46 = vadd.f32 %v42, %v45
    %vm47 = vweird.f32 %v41
    %vm48 = vweird.f32 %v42
    %vm49 = vmor %vm47, %vm48
    %v50 = vsel %vm49, %v42, %v46
    %v51 = vand.u32 2147483647, %v41
    %vm52 = vcmp.eq.f32.partialorder %v51, 8.507059e+37
    %v53 = vand.u32 %v41, 2147483648
    %v54 = vor.u32 1.1754944e-38, %v53
    %v55 = vsel %vm52, %v54, %v50
    %v56 = vmul.f32 %v34, %v55
    %57 = vst.msk [vmem:[#allocation5] sm:$0xff] %vm24, %v56
    // Predicated region
    $region10: #{tpu_custom_call.1} parent=1 // pred_check
      _
    $region11: #{tpu_custom_call.1} parent=1 // pred_check_branch
      %59 = sbr.rel (0) target = $region13
    $region12: #{tpu_custom_call.1} parent=1 // pred_region
      %61 = vsyncadd [#allocation4], 0
      %s63 = sshll.u32 [#allocation5], 4
      %s64 = int_to_ptr.vmem [resolvable:$true] %s63
      %s65 = sshll.u32 %s1, 4
      %s66 = int_to_ptr.hbm [resolvable:$true] %s65
      %68 = dma.vmem_to_hbm [thread:$0]  %s64, 128, %s66, [#allocation4]
    $region13: #{tpu_custom_call.1} parent=1 // pred_fallthru
      _
    // Predicated region
    $region14: #{tpu_custom_call.1} parent=1 // pred_check
      _
    $region15: #{tpu_custom_call.1} parent=1 // pred_check_branch
      %70 = sbr.rel (0) target = $region17
    $region16: #{tpu_custom_call.1} parent=1 // pred_region
      %72 = dma.done [#allocation4], 128
    $region17: #{tpu_custom_call.1} parent=1 // pred_fallthru
      _
    %73 = vsyncpa [#allocation3], 1
    %74 = vsyncpa [#allocation4], 1

</llo_original>
